<compile_context>
chip_gen: v5e
topology: v5e:2x2
jax: 0.10.0
libtpu: 0.0.40
codegen_flags: <defaults>
</compile_context>

<pallas_src>
import jax
import jax.numpy as jnp
from jax.experimental import pallas as pl
from jax.experimental.pallas import tpu as pltpu

IN_DIM = 16    # 2 * 2**3
HID_DIM = 32   # 2 * 2**4
OUT_DIM = 16   # 2 * 2**3

LANE = 128     # TPU lane width
MAX_TB = 512   # batch tile size along the lane axis


def _round_up(n, m):
    return ((n + m - 1) // m) * m


def mlp_kernel(x_ref, w1_ref, b1_ref, w2_ref, b2_ref, o_ref):
    # Operands (batch tile on the lane/last axis):
    #   x_ref : (IN_DIM,  TB)   w1_ref: (HID_DIM, IN_DIM)   b1_ref: (HID_DIM, 1)
    #   o_ref : (OUT_DIM, TB)   w2_ref: (OUT_DIM, HID_DIM)  b2_ref: (OUT_DIM, 1)
    x = x_ref[...]
    # Layer 1: Linear(16 -> 32) + ReLU; free (lane) dim is the batch tile.
    h = jnp.dot(w1_ref[...], x, preferred_element_type=jnp.float32)
    h = jnp.maximum(h + b1_ref[...], 0.0)
    # Layer 2: Linear(32 -> 16)
    y = jnp.dot(w2_ref[...], h, preferred_element_type=jnp.float32)
    o_ref[...] = (y + b2_ref[...]).astype(o_ref.dtype)


def neural_network_16_32_16(x, w1, b1, w2, b2):
    """Forward pass matching the PyTorch module.

    x : (B, 16) float32
    w1: (32, 16), b1: (32,)   -- PyTorch nn.Linear(16, 32) layout (out, in)
    w2: (16, 32), b2: (16,)   -- PyTorch nn.Linear(32, 16) layout (out, in)
    returns (B, 16) float32
    """
    # NOTE: for truly tiny B a plain fused jnp expression would beat the
    # kernel-launch overhead; the Pallas path below is the streamed version.
    B = x.shape[0]

    # Put the batch axis on the 128-lane axis; pad it to a full tile.
    tb = min(MAX_TB, _round_up(max(B, 1), LANE))
    b_pad = _round_up(max(B, 1), tb)
    x_t = x.T                                     # (IN_DIM, B)
    if b_pad != B:
        x_t = jnp.pad(x_t, ((0, 0), (0, b_pad - B)))

    b1_col = b1.reshape(HID_DIM, 1)
    b2_col = b2.reshape(OUT_DIM, 1)

    grid = (b_pad // tb,)
    const = lambda shape: pl.BlockSpec(shape, lambda i: (0, 0))  # resident tiles

    y_t = pl.pallas_call(
        mlp_kernel,
        out_shape=jax.ShapeDtypeStruct((OUT_DIM, b_pad), jnp.float32),
        grid=grid,
        in_specs=[
            pl.BlockSpec((IN_DIM, tb), lambda i: (0, i)),   # streamed x tiles
            const((HID_DIM, IN_DIM)),                       # W1 (loaded once)
            const((HID_DIM, 1)),                            # b1
            const((OUT_DIM, HID_DIM)),                      # W2
            const((OUT_DIM, 1)),                            # b2
        ],
        out_specs=pl.BlockSpec((OUT_DIM, tb), lambda i: (0, i)),  # lane-dense out
        compiler_params=pltpu.CompilerParams(
            dimension_semantics=("parallel",)),
    )(x_t, w1, b1_col, w2, b2_col)

    return y_t[:, :B].T


def init_params(key):
    """Deterministic init mimicking PyTorch nn.Linear default (+/- 1/sqrt(fan_in))."""
    k1, k2, k3, k4 = jax.random.split(key, 4)
    bound1 = 1.0 / jnp.sqrt(IN_DIM)
    bound2 = 1.0 / jnp.sqrt(HID_DIM)
    # Stored in PyTorch (out_features, in_features) layout.
    w1 = jax.random.uniform(k1, (HID_DIM, IN_DIM), jnp.float32, -bound1, bound1)
    b1 = jax.random.uniform(k2, (HID_DIM,), jnp.float32, -bound1, bound1)
    w2 = jax.random.uniform(k3, (OUT_DIM, HID_DIM), jnp.float32, -bound2, bound2)
    b2 = jax.random.uniform(k4, (OUT_DIM,), jnp.float32, -bound2, bound2)
    return w1, b1, w2, b2


if __name__ == "__main__":
    key = jax.random.PRNGKey(0)
    kx, kp = jax.random.split(key)
    w1, b1, w2, b2 = init_params(kp)

    ok = True
    # Small case (matches spec-scale inputs) + a multi-tile case that exercises
    # the streamed/pipelined grid path.
    for batch in (8, 1024):
        x = jax.random.normal(jax.random.fold_in(kx, batch),
                              (batch, IN_DIM), jnp.float32)
        out = neural_network_16_32_16(x, w1, b1, w2, b2)
        jax.block_until_ready(out)

        # Reference in plain JAX (same math as the PyTorch module).
        ref = jnp.maximum(x @ w1.T + b1, 0.0) @ w2.T + b2
        ok &= (out.shape == (batch, OUT_DIM))
        ok &= bool(jnp.allclose(out, ref, atol=1e-5, rtol=1e-5))

    assert ok
    print("KERNEL_OK")
</pallas_src>

<mosaic_0001>
module attributes {stable_mosaic.version = 11 : i64} {
  func.func @mlp_kernel(%arg0: i32, %arg1: memref<16x128xf32, #tpu.memory_space<vmem>>, %arg2: memref<32x16xf32, #tpu.memory_space<vmem>>, %arg3: memref<32x1xf32, #tpu.memory_space<vmem>>, %arg4: memref<16x32xf32, #tpu.memory_space<vmem>>, %arg5: memref<16x1xf32, #tpu.memory_space<vmem>>, %arg6: memref<16x128xf32, #tpu.memory_space<vmem>>) attributes {dimension_semantics = [#tpu.dimension_semantics<parallel>], iteration_bounds = array<i64: 1>, scalar_prefetch = 0 : i64, scratch_operands = 0 : i64, tpu.core_type = #tpu.core_type<tc>, window_params = [{transform_indices = @transform_0, window_bounds = array<i64: 16, 128>}, {pipeline_mode = #tpu.pipeline_mode<synchronous>, transform_indices = @transform_1, window_bounds = array<i64: 32, 16>}, {pipeline_mode = #tpu.pipeline_mode<synchronous>, transform_indices = @transform_2, window_bounds = array<i64: 32, 1>}, {pipeline_mode = #tpu.pipeline_mode<synchronous>, transform_indices = @transform_3, window_bounds = array<i64: 16, 32>}, {pipeline_mode = #tpu.pipeline_mode<synchronous>, transform_indices = @transform_4, window_bounds = array<i64: 16, 1>}, {transform_indices = @transform_5, window_bounds = array<i64: 16, 128>}]} {
    %c0 = arith.constant 0 : index
    %c0_0 = arith.constant 0 : index
    %0 = vector.load %arg1[%c0, %c0_0] : memref<16x128xf32, #tpu.memory_space<vmem>>, vector<16x128xf32>
    %c0_1 = arith.constant 0 : index
    %c0_2 = arith.constant 0 : index
    %1 = vector.load %arg2[%c0_1, %c0_2] : memref<32x16xf32, #tpu.memory_space<vmem>>, vector<32x16xf32>
    %cst = arith.constant dense<0.000000e+00> : vector<32x128xf32>
    %2 = tpu.matmul %1, %0, %cst {dimension_numbers = #tpu.dot_dimension_numbers<[1], [0], [0], [1], [0, 0, 1, 1], [], []>} : vector<32x16xf32>, vector<16x128xf32>, vector<32x128xf32> -> vector<32x128xf32>
    %c0_3 = arith.constant 0 : index
    %c0_4 = arith.constant 0 : index
    %3 = vector.load %arg3[%c0_3, %c0_4] : memref<32x1xf32, #tpu.memory_space<vmem>>, vector<32x1xf32>
    %4 = vector.broadcast %3 : vector<32x1xf32> to vector<32x128xf32>
    %5 = arith.addf %2, %4 : vector<32x128xf32>
    %cst_5 = arith.constant 0.000000e+00 : f32
    %6 = vector.broadcast %cst_5 : f32 to vector<32x128xf32>
    %7 = arith.maximumf %5, %6 : vector<32x128xf32>
    %c0_6 = arith.constant 0 : index
    %c0_7 = arith.constant 0 : index
    %8 = vector.load %arg4[%c0_6, %c0_7] : memref<16x32xf32, #tpu.memory_space<vmem>>, vector<16x32xf32>
    %cst_8 = arith.constant dense<0.000000e+00> : vector<16x128xf32>
    %9 = tpu.matmul %8, %7, %cst_8 {dimension_numbers = #tpu.dot_dimension_numbers<[1], [0], [0], [1], [0, 0, 1, 1], [], []>} : vector<16x32xf32>, vector<32x128xf32>, vector<16x128xf32> -> vector<16x128xf32>
    %c0_9 = arith.constant 0 : index
    %c0_10 = arith.constant 0 : index
    %10 = vector.load %arg5[%c0_9, %c0_10] : memref<16x1xf32, #tpu.memory_space<vmem>>, vector<16x1xf32>
    %11 = vector.broadcast %10 : vector<16x1xf32> to vector<16x128xf32>
    %12 = arith.addf %9, %11 : vector<16x128xf32>
    %c0_11 = arith.constant 0 : index
    %c0_12 = arith.constant 0 : index
    %13 = vector.load %arg6[%c0_11, %c0_12] : memref<16x128xf32, #tpu.memory_space<vmem>>, vector<16x128xf32>
    tpu.vector_store %arg6[%c0_11, %c0_12], %12 {strides = array<i32>} : memref<16x128xf32, #tpu.memory_space<vmem>>, vector<16x128xf32>,
    return
  }
  func.func @transform_0(%arg0: i32) -> (i32, i32) {
    %c0_i32 = arith.constant 0 : i32
    %c0_i32_0 = arith.constant 0 : i32
    return %c0_i32, %arg0 : i32, i32
  }
  func.func @transform_1(%arg0: i32) -> (i32, i32) {
    %c0_i32 = arith.constant 0 : i32
    %c0_i32_0 = arith.constant 0 : i32
    %c0_i32_1 = arith.constant 0 : i32
    return %c0_i32, %c0_i32_0 : i32, i32
  }
  func.func @transform_2(%arg0: i32) -> (i32, i32) {
    %c0_i32 = arith.constant 0 : i32
    %c0_i32_0 = arith.constant 0 : i32
    %c0_i32_1 = arith.constant 0 : i32
    return %c0_i32, %c0_i32_0 : i32, i32
  }
  func.func @transform_3(%arg0: i32) -> (i32, i32) {
    %c0_i32 = arith.constant 0 : i32
    %c0_i32_0 = arith.constant 0 : i32
    %c0_i32_1 = arith.constant 0 : i32
    return %c0_i32, %c0_i32_0 : i32, i32
  }
  func.func @transform_4(%arg0: i32) -> (i32, i32) {
    %c0_i32 = arith.constant 0 : i32
    %c0_i32_0 = arith.constant 0 : i32
    %c0_i32_1 = arith.constant 0 : i32
    return %c0_i32, %c0_i32_0 : i32, i32
  }
  func.func @transform_5(%arg0: i32) -> (i32, i32) {
    %c0_i32 = arith.constant 0 : i32
    %c0_i32_0 = arith.constant 0 : i32
    return %c0_i32, %arg0 : i32, i32
  }
}

</mosaic_0001>

<llo_original>
// kernel: tpu_custom_call.1
$region0: #{tpu_custom_call.1}
  #allocation0 [shape = 'u32[]', space=smem, size = 0x4, offset = 0x4, fixed_abs, tag = 'smem constant byte address 0x4 - core index']
  #allocation1 [shape = 'u32[72,128]{1,0:T(1,128)}', space=vmem, size = 0x9000, scoped, tag = 'internal scratch']
  %s0 = inlined_call_operand.vmem [shape: f32[16,128], index: 0, kind: input, shape index: {}]
  %s1 = inlined_call_operand.vmem [shape: f32[32,16], index: 1, kind: input, shape index: {}]
  %s2 = inlined_call_operand.vmem [shape: f32[32,1], index: 2, kind: input, shape index: {}]
  %s3 = inlined_call_operand.vmem [shape: f32[16,32], index: 3, kind: input, shape index: {}]
  %s4 = inlined_call_operand.vmem [shape: f32[16,1], index: 4, kind: input, shape index: {}]
  %s5 = inlined_call_operand.hbm [shape: f32[16,128], index: 5, kind: output, shape index: {}]
  %s6 = sld [smem:[#allocation0]]
  $region30: #{tpu_custom_call.1} parent=0
    _
  %s8 = ssub.s32 1, %s6
  %s9 = scalar_select 0, %s8, %s6
  $region1: #{tpu_custom_call.1} parent=0
    #allocation2 [shape = 'u8[8192]{0}', space=vmem, size = 0x2000, scoped, tag = 'output window, operand 0, single buffered']
    #allocation3 [shape = 's32[1]{0}', space=sflag, size = 0x4, scoped, tag = 'scoped memory for tpu_custom_call.1']
    %10 = vsyncpa [#allocation3], 0
    // Predicated region
    $region2: #{tpu_custom_call.1} parent=1 // pred_check
      _
    $region3: #{tpu_custom_call.1} parent=1 // pred_check_branch
      %12 = sbr.rel (0) target = $region5
    $region4: #{tpu_custom_call.1} parent=1 // pred_region
      _
    $region5: #{tpu_custom_call.1} parent=1 // pred_fallthru
      _
    // Predicated region
    $region6: #{tpu_custom_call.1} parent=1 // pred_check
      _
    $region7: #{tpu_custom_call.1} parent=1 // pred_check_branch
      %14 = sbr.rel (0) target = $region9
    $region8: #{tpu_custom_call.1} parent=1 // pred_region
      _
    $region9: #{tpu_custom_call.1} parent=1 // pred_fallthru
      _
    // Predicated region
    $region10: #{tpu_custom_call.1} parent=1 // pred_check
      _
    $region11: #{tpu_custom_call.1} parent=1 // pred_check_branch
      %16 = sbr.rel (0) target = $region13
    $region12: #{tpu_custom_call.1} parent=1 // pred_region
      _
    $region13: #{tpu_custom_call.1} parent=1 // pred_fallthru
      _
    // Predicated region
    $region14: #{tpu_custom_call.1} parent=1 // pred_check
      _
    $region15: #{tpu_custom_call.1} parent=1 // pred_check_branch
      %18 = sbr.rel (0) target = $region17
    $region16: #{tpu_custom_call.1} parent=1 // pred_region
      _
    $region17: #{tpu_custom_call.1} parent=1 // pred_fallthru
      _
    // Predicated region
    $region18: #{tpu_custom_call.1} parent=1 // pred_check
      _
    $region19: #{tpu_custom_call.1} parent=1 // pred_check_branch
      %20 = sbr.rel (0) target = $region21
    $region20: #{tpu_custom_call.1} parent=1 // pred_region
      _
    $region21: #{tpu_custom_call.1} parent=1 // pred_fallthru
      _
    %v21 = vld [vmem:[%s0] sm:$0xff]
    %v22 = vld [vmem:[%s0 + $0x8] sm:$0xff]
    %v23 = vld [vmem:[%s1] sm:$0xff]
    %v24 = vld [vmem:[%s1 + $0x8] sm:$0xff]
    %v25 = vld [vmem:[%s1 + $0x10] sm:$0xff]
    %v26 = vld [vmem:[%s1 + $0x18] sm:$0xff]
    %v27 = vld [vmem:[%s2] sm:$0xff]
    %v28 = vld [vmem:[%s2 + $0x8] sm:$0xff]
    %v29 = vld [vmem:[%s2 + $0x10] sm:$0xff]
    %v30 = vld [vmem:[%s2 + $0x18] sm:$0xff]
    %32 = vset.pattern.permute.xlu0 0
    %33 = vperm.xlu0 %32, %v27
    %v34 = vpop.permute.xlu0 %33
    %37 = vset.pattern.permute.xlu0 0
    %38 = vperm.xlu0 %37, %v28
    %v39 = vpop.permute.xlu0 %38
    %42 = vset.pattern.permute.xlu0 0
    %43 = vperm.xlu0 %42, %v29
    %v44 = vpop.permute.xlu0 %43
    %47 = vset.pattern.permute.xlu0 0
    %48 = vperm.xlu0 %47, %v30
    %v49 = vpop.permute.xlu0 %48
    %vm51 = vcmask 130048
    %v53 = vsel %vm51, %v23, 0
    %v56 = vsel %vm51, %v24, 0
    %v59 = vsel %vm51, %v25, 0
    %v62 = vsel %vm51, %v26, 0
    %64 = vmatpush.msra.mxu0 0.0
    %65 = vmatpush.msra.mxu0 0.0
    %66 = vmatpush.msra.mxu0 0.0
    %67 = vmatpush.msra.mxu0 0.0
    %68 = vmatpush.msra.mxu0 0.0
    %69 = vmatpush.msra.mxu0 0.0
    %70 = vmatpush.msra.mxu0 0.0
    %71 = vmatpush.msra.mxu0 0.0
    %72 = vmatpush.msra.mxu0 0.0
    %73 = vmatpush.msra.mxu0 0.0
    %74 = vmatpush.msra.mxu0 0.0
    %75 = vmatpush.msra.mxu0 0.0
    %76 = vmatpush.msra.mxu0 0.0
    %77 = vmatpush.msra.mxu0 0.0
    %78 = vmatpush.msra.mxu0 %v22
    %79 = vmatpush.msra.mxu0 %v21
    %80 = vmatmul.f32.gmra.mxu0 %v53
    %v81 = vpop.f32.mrf.mxu0
    %v82 = vadd.f32 %v34, %v81
    %83 = vmatmul.f32.gmra.mxu0 %v56
    %v84 = vpop.f32.mrf.mxu0
    %v85 = vadd.f32 %v39, %v84
    %86 = vmatmul.f32.gmra.mxu0 %v59
    %v87 = vpop.f32.mrf.mxu0
    %v88 = vadd.f32 %v44, %v87
    %89 = vmatmul.f32.gmra.mxu0 %v62
    %v90 = vpop.f32.mrf.mxu0
    %v91 = vadd.f32 %v49, %v90
    %92 = vdwg.mxu0
    %v93 = vmax.f32 %v82, 0.0
    %v94 = vmax.f32 %v85, 0.0
    %v95 = vmax.f32 %v88, 0.0
    %v96 = vmax.f32 %v91, 0.0
    %v97 = vld [vmem:[%s3] sm:$0xff]
    %v98 = vld [vmem:[%s3 + $0x8] sm:$0xff]
    %v99 = vld [vmem:[%s4] sm:$0xff]
    %v100 = vld [vmem:[%s4 + $0x8] sm:$0xff]
    %102 = vset.pattern.permute.xlu0 0
    %103 = vperm.xlu0 %102, %v99
    %v104 = vpop.permute.xlu0 %103
    %107 = vset.pattern.permute.xlu0 0
    %108 = vperm.xlu0 %107, %v100
    %v109 = vpop.permute.xlu0 %108
    %vm111 = vcmask 261120
    %v113 = vsel %vm111, %v97, 0
    %v116 = vsel %vm111, %v98, 0
    %118 = vmatpush.msra.mxu0 0.0
    %119 = vmatpush.msra.mxu0 0.0
    %120 = vmatpush.msra.mxu0 0.0
    %121 = vmatpush.msra.mxu0 0.0
    %122 = vmatpush.msra.mxu0 0.0
    %123 = vmatpush.msra.mxu0 0.0
    %124 = vmatpush.msra.mxu0 0.0
    %125 = vmatpush.msra.mxu0 0.0
    %126 = vmatpush.msra.mxu0 0.0
    %127 = vmatpush.msra.mxu0 0.0
    %128 = vmatpush.msra.mxu0 0.0
    %129 = vmatpush.msra.mxu0 0.0
    %130 = vmatpush.msra.mxu0 %v96
    %131 = vmatpush.msra.mxu0 %v95
    %132 = vmatpush.msra.mxu0 %v94
    %133 = vmatpush.msra.mxu0 %v93
    %134 = vmatmul.f32.gmra.mxu0 %v113
    %v135 = vpop.f32.mrf.mxu0
    %v136 = vadd.f32 %v104, %v135
    %137 = vmatmul.f32.gmra.mxu0 %v116
    %v138 = vpop.f32.mrf.mxu0
    %v139 = vadd.f32 %v109, %v138
    %140 = vdwg.mxu0
    %141 = vst [vmem:[#allocation2] sm:$0xff] %v136
    %142 = vst [vmem:[#allocation2 + $0x8] sm:$0xff] %v139
    // Predicated region
    $region22: #{tpu_custom_call.1} parent=1 // pred_check
      _
    $region23: #{tpu_custom_call.1} parent=1 // pred_check_branch
      %144 = sbr.rel (0) target = $region25
    $region24: #{tpu_custom_call.1} parent=1 // pred_region
      %146 = vsyncadd [#allocation3], 0
      %s147 = sshll.u32 [#allocation2], 4
      %s148 = int_to_ptr.vmem [resolvable:$true] %s147
      %s149 = sshll.u32 %s5, 4
      %s150 = int_to_ptr.hbm [resolvable:$true] %s149
      %155 = dma.vmem_to_hbm [thread:$0]  %s148, 256, %s150, [#allocation3], 128, 128, 8
    $region25: #{tpu_custom_call.1} parent=1 // pred_fallthru
      _
    // Predicated region
    $region26: #{tpu_custom_call.1} parent=1 // pred_check
      _
    $region27: #{tpu_custom_call.1} parent=1 // pred_check_branch
      %157 = sbr.rel (0) target = $region29
    $region28: #{tpu_custom_call.1} parent=1 // pred_region
      %159 = dma.done [#allocation3], 256
    $region29: #{tpu_custom_call.1} parent=1 // pred_fallthru
      _
    %160 = vsyncpa [#allocation3], 1

</llo_original>
